<compile_context>
chip_gen: v7x
topology: tpu7x:2x2x1
jax: 0.10.0
libtpu: 0.0.40
codegen_flags: <defaults>
</compile_context>

<pallas_src>
import numpy as np
import jax
import jax.numpy as jnp
from jax import lax
from jax.experimental import pallas as pl
from jax.experimental.pallas import tpu as pltpu

IMG_OUTPUT_SIZE = 38400  # fixed by the module (self.img_output_size)
N_LABELS = 9


# ----------------------------------------------------------------------------
# Kernel 1: synthetic feature extractor = 1x1 conv as a per-image matmul.
#   Per image n: (Cout, Cin) @ (Cin, H*W) + b  ->  (Cout, H*W)
#   The (Cout, H*W) row-major tile IS the NCHW-flatten ordering, so the wrapper
#   only does a free contiguous reshape afterwards.
# ----------------------------------------------------------------------------
def _conv1x1_kernel(x_ref, w_ref, b_ref, o_ref):
    # x: (Cin, HW), w: (Cout, Cin), b: (Cout, 1) -> o: (Cout, HW)
    o_ref[...] = (
        jnp.dot(w_ref[...], x_ref[...], preferred_element_type=jnp.float32)
        + b_ref[...]
    )


def conv1x1(x_nchw_flat, w, b):
    # x_nchw_flat: (N, Cin, H*W), w: (Cout, Cin), b: (Cout, 1)
    N, Cin, HW = x_nchw_flat.shape
    Cout = w.shape[0]
    return pl.pallas_call(
        _conv1x1_kernel,
        out_shape=jax.ShapeDtypeStruct((N, Cout, HW), jnp.float32),
        grid=(N,),
        in_specs=[
            pl.BlockSpec((None, Cin, HW), lambda n: (n, 0, 0)),
            pl.BlockSpec((Cout, Cin), lambda n: (0, 0)),
            pl.BlockSpec((Cout, 1), lambda n: (0, 0)),
        ],
        out_specs=pl.BlockSpec((None, Cout, HW), lambda n: (n, 0, 0)),
        compiler_params=pltpu.CompilerParams(
            dimension_semantics=("parallel",)
        ),
    )(x_nchw_flat, w, b)


# ----------------------------------------------------------------------------
# Kernel 2: classification head + grouped mean, K-tiled over the feature dim.
#   acc (N, L) += feat_blk (N, tk) @ w_blk (L, tk)^T       (lane-dense weight)
#   final step:  out (G, L) = avg (G, N) @ (acc + bias)     (tiny matmul)
# ----------------------------------------------------------------------------
def _group_head_kernel(avg_ref, feat_ref, wt_ref, b_ref, out_ref, acc_ref):
    k = pl.program_id(0)

    @pl.when(k == 0)
    def _():
        acc_ref[...] = jnp.zeros_like(acc_ref)

    # trans_b contraction: contract feat's lane axis against w's lane axis.
    acc_ref[...] += lax.dot_general(
        feat_ref[...],
        wt_ref[...],
        dimension_numbers=(((1,), (1,)), ((), ())),
        preferred_element_type=jnp.float32,
    )

    @pl.when(k == pl.num_programs(0) - 1)
    def _():
        logits = acc_ref[...] + b_ref[...]  # (N, L) + (1, L)
        out_ref[...] = jnp.dot(
            avg_ref[...], logits, preferred_element_type=jnp.float32
        )


def group_head(feat_flat, avg_mat, w_t, b, *, tk=7680):
    # feat_flat: (N, D) f32, avg_mat: (G, N) f32,
    # w_t: (L, D) f32 (native nn.Linear layout), b: (1, L) f32
    N, D = feat_flat.shape
    L = w_t.shape[0]
    G = avg_mat.shape[0]

    if D % tk != 0 or tk % 128 != 0:
        tk = D  # fall back to a single K step
    n_k = D // tk

    grid_spec = pltpu.PrefetchScalarGridSpec(
        num_scalar_prefetch=0,
        grid=(n_k,),
        in_specs=[
            pl.BlockSpec((G, N), lambda k: (0, 0)),
            pl.BlockSpec((N, tk), lambda k: (0, k)),
            pl.BlockSpec((L, tk), lambda k: (0, k)),
            pl.BlockSpec((1, L), lambda k: (0, 0)),
        ],
        out_specs=pl.BlockSpec((G, L), lambda k: (0, 0)),
        scratch_shapes=[pltpu.VMEM((N, L), jnp.float32)],
    )
    return pl.pallas_call(
        _group_head_kernel,
        out_shape=jax.ShapeDtypeStruct((G, L), jnp.float32),
        grid_spec=grid_spec,
        compiler_params=pltpu.CompilerParams(
            dimension_semantics=("arbitrary",)  # K reduction axis
        ),
    )(avg_mat, feat_flat, w_t, b)


# ----------------------------------------------------------------------------
# DTmodel1 forward
# ----------------------------------------------------------------------------
def dtmodel1_forward(image, id_length, params):
    """image: (N, C, H, W) NCHW; id_length: list of python ints (group sizes)."""
    N, C, H, W = image.shape

    # --- image_encoder.extract_features (synthetic 1x1 conv, Pallas matmul) ---
    x = image.reshape(N, C, H * W)  # free, contiguous
    feat = conv1x1(x, params["conv_w"], params["conv_b"])  # (N, Cout, H*W)
    Cout = params["conv_w"].shape[0]
    feat_flat = feat.reshape(N, Cout * H * W)  # NCHW flatten order, free reshape
    assert feat_flat.shape[1] == IMG_OUTPUT_SIZE

    # --- host-built group-averaging matrix (id_length are static python ints) ---
    id_np = np.asarray(id_length, dtype=np.int64)
    G = int(id_np.shape[0])
    offsets = np.concatenate([[0], np.cumsum(id_np)[:-1]])
    assert int(id_np.sum()) <= N, "id_length groups exceed the image batch"
    avg = np.zeros((G, N), dtype=np.float32)
    for g in range(G):
        o, length = int(offsets[g]), int(id_np[g])
        if length > 0:
            avg[g, o : o + length] = 1.0 / float(length)
        # TODO(synk): length == 0 yields a zero row here; original PyTorch
        # returns NaN for a mean over an empty slice.
    avg = jnp.asarray(avg)

    # --- head + grouped mean fused in one Pallas kernel ---
    return group_head(
        feat_flat, avg, params["head_w"], params["head_b"]
    )  # (num_groups, n_labels)


def init_params(key, c_in=4, c_out=150, n_labels=N_LABELS):
    k1, k2, k3, k4 = jax.random.split(key, 4)
    return {
        # synthetic 1x1 conv standing in for cnn_model.extract_features
        "conv_w": jax.random.normal(k1, (c_out, c_in), jnp.float32) * 0.1,
        "conv_b": jax.random.normal(k2, (c_out, 1), jnp.float32) * 0.1,
        # nn.Linear(38400, n_labels): native (L, D) layout (lane-dense on TPU)
        "head_w": jax.random.normal(
            k3, (n_labels, IMG_OUTPUT_SIZE), jnp.float32
        )
        * 0.01,
        "head_b": jax.random.normal(k4, (1, n_labels), jnp.float32) * 0.01,
    }


if __name__ == "__main__":
    key = jax.random.PRNGKey(0)
    k_img, k_par = jax.random.split(key)

    # Small shapes consistent with the module: 6 images grouped as [2, 3, 1];
    # C=4, H=W=16; the synthetic feature extractor maps to 150 channels so the
    # flattened features are 150*16*16 = 38400 (= self.img_output_size).
    N, C, H, W = 6, 4, 16, 16
    id_length = [2, 3, 1]

    image = jax.random.normal(k_img, (N, C, H, W), jnp.float32)
    params = init_params(k_par, c_in=C, c_out=150, n_labels=N_LABELS)

    out = dtmodel1_forward(image, id_length, params)
    out = jax.block_until_ready(out)

    assert out.shape == (len(id_length), N_LABELS), out.shape
    assert bool(jnp.all(jnp.isfinite(out)))
    print("KERNEL_OK")
</pallas_src>

<mosaic_0001>
module attributes {stable_mosaic.version = 11 : i64} {
  func.func @_conv1x1_kernel(%arg0: i32, %arg1: memref<1x4x256xf32, #tpu.memory_space<vmem>>, %arg2: memref<150x4xf32, #tpu.memory_space<vmem>>, %arg3: memref<150x1xf32, #tpu.memory_space<vmem>>, %arg4: memref<1x150x256xf32, #tpu.memory_space<vmem>>) attributes {dimension_semantics = [#tpu.dimension_semantics<parallel>], iteration_bounds = array<i64: 6>, scalar_prefetch = 0 : i64, scratch_operands = 0 : i64, tpu.core_type = #tpu.core_type<tc>, window_params = [{transform_indices = @transform_0, window_bounds = array<i64: 1, 4, 256>}, {pipeline_mode = #tpu.pipeline_mode<synchronous>, transform_indices = @transform_1, window_bounds = array<i64: 150, 4>}, {pipeline_mode = #tpu.pipeline_mode<synchronous>, transform_indices = @transform_2, window_bounds = array<i64: 150, 1>}, {transform_indices = @transform_3, window_bounds = array<i64: 1, 150, 256>}]} {
    %c0 = arith.constant 0 : index
    %c0_0 = arith.constant 0 : index
    %0 = vector.load %arg2[%c0, %c0_0] : memref<150x4xf32, #tpu.memory_space<vmem>>, vector<150x4xf32>
    %c0_1 = arith.constant 0 : index
    %c0_2 = arith.constant 0 : index
    %c0_3 = arith.constant 0 : index
    %1 = vector.load %arg1[%c0_1, %c0_2, %c0_3] : memref<1x4x256xf32, #tpu.memory_space<vmem>>, vector<1x4x256xf32>
    %2 = vector.shape_cast %1 : vector<1x4x256xf32> to vector<4x256xf32>
    %cst = arith.constant dense<0.000000e+00> : vector<150x256xf32>
    %3 = tpu.matmul %0, %2, %cst {dimension_numbers = #tpu.dot_dimension_numbers<[1], [0], [0], [1], [0, 0, 1, 1], [], []>} : vector<150x4xf32>, vector<4x256xf32>, vector<150x256xf32> -> vector<150x256xf32>
    %c0_4 = arith.constant 0 : index
    %c0_5 = arith.constant 0 : index
    %4 = vector.load %arg3[%c0_4, %c0_5] : memref<150x1xf32, #tpu.memory_space<vmem>>, vector<150x1xf32>
    %5 = vector.broadcast %4 : vector<150x1xf32> to vector<150x256xf32>
    %6 = arith.addf %3, %5 : vector<150x256xf32>
    %c0_6 = arith.constant 0 : index
    %c0_7 = arith.constant 0 : index
    %c0_8 = arith.constant 0 : index
    %7 = vector.load %arg4[%c0_6, %c0_7, %c0_8] : memref<1x150x256xf32, #tpu.memory_space<vmem>>, vector<1x150x256xf32>
    %8 = vector.shape_cast %7 : vector<1x150x256xf32> to vector<150x256xf32>
    %9 = vector.shape_cast %6 : vector<150x256xf32> to vector<1x150x256xf32>
    tpu.vector_store %arg4[%c0_6, %c0_7, %c0_8], %9 {strides = array<i32>} : memref<1x150x256xf32, #tpu.memory_space<vmem>>, vector<1x150x256xf32>,
    return
  }
  func.func @transform_0(%arg0: i32) -> (i32, i32, i32) {
    %c0_i32 = arith.constant 0 : i32
    %c0_i32_0 = arith.constant 0 : i32
    %c0_i32_1 = arith.constant 0 : i32
    return %arg0, %c0_i32, %c0_i32_0 : i32, i32, i32
  }
  func.func @transform_1(%arg0: i32) -> (i32, i32) {
    %c0_i32 = arith.constant 0 : i32
    %c0_i32_0 = arith.constant 0 : i32
    %c0_i32_1 = arith.constant 0 : i32
    return %c0_i32, %c0_i32_0 : i32, i32
  }
  func.func @transform_2(%arg0: i32) -> (i32, i32) {
    %c0_i32 = arith.constant 0 : i32
    %c0_i32_0 = arith.constant 0 : i32
    %c0_i32_1 = arith.constant 0 : i32
    return %c0_i32, %c0_i32_0 : i32, i32
  }
  func.func @transform_3(%arg0: i32) -> (i32, i32, i32) {
    %c0_i32 = arith.constant 0 : i32
    %c0_i32_0 = arith.constant 0 : i32
    %c0_i32_1 = arith.constant 0 : i32
    return %arg0, %c0_i32, %c0_i32_0 : i32, i32, i32
  }
}

</mosaic_0001>

<llo_original>
// kernel: tpu_custom_call.1
$region0: #{tpu_custom_call.1}
  #allocation0 [shape = 'u32[]', space=smem, size = 0x4, offset = 0x4, fixed_abs, tag = 'smem constant byte address 0x4 - core index']
  #allocation1 [shape = 'u32[144,128]{1,0:T(1,128)}', space=vmem, size = 0x12000, scoped, tag = 'internal scratch']
  %s0 = inlined_call_operand.vmem [shape: f32[6,4,256], index: 0, kind: input, shape index: {}]
  %s1 = inlined_call_operand.vmem [shape: f32[150,4], index: 1, kind: input, shape index: {}]
  %s2 = inlined_call_operand.vmem [shape: f32[150,1], index: 2, kind: input, shape index: {}]
  %s3 = inlined_call_operand.hbm [shape: f32[6,150,256], index: 3, kind: output, shape index: {}]
  %s4 = sld [smem:[#allocation0]]
  $region45: #{tpu_custom_call.1} parent=0
    _
  %s6 = ssub.s32 1, %s4
  %s7 = scalar_select 0, %s6, %s4
  $region1: #{tpu_custom_call.1} parent=0
    #allocation2 [shape = 'u8[311296]{0}', space=vmem, size = 0x4c000, scoped, tag = 'output window, operand 0']
    #allocation3 [shape = 's32[2]{0}', space=sflag, size = 0x8, scoped, tag = 'scoped memory for tpu_custom_call.1']
    %8 = vsyncpa [#allocation3], 0
    %s9 = scalar_lea.sflag [#allocation3], 1
    %10 = vsyncpa %s9, 0
    loop: start=0, step=1, limit=8
    $region2: #{tpu_custom_call.1} parent=1 // loop_pre_header
      _
    $region3: #{tpu_custom_call.1} parent=1 // loop_header
      %s12 = sphi 0, %s16
      %p13 = scmp.ge.s32.totalorder %s12, 8
      %s22 = sphi 0, %s24
      %s25 = sphi 0, %s22
      %s26 = sphi 0, %s25
      %s42 = sphi 0, %s26
      %s46 = sphi 0, %s46
      %s48 = sphi 0, %s46
      %s49 = sphi 0, %s48
      %s63 = sphi 0, %s49
      %s67 = sphi 0, %s67
      %s69 = sphi 0, %s67
      %s70 = sphi 0, %s69
      %s84 = sphi 0, %s70
      %s90 = sphi 0, %s92
      %s93 = sphi 0, %s90
      %s94 = sphi 0, %s93
      %s110 = sphi 0, %s94
    $region4: #{tpu_custom_call.1} parent=1 // loop_header_branch
      %15 = sbr.rel (%p13) target = $region8
    $region5: #{tpu_custom_call.1} parent=1 // loop_body
      %s17 = ssub.s32 %s12, 1
      %s18 = ssub.s32 %s12, 2
      %s19 = sadd.s32 %s12, 1
      %s20 = ssub.s32 %s12, %s19
      %p21 = scmp.eq.s32.totalorder %s20, 0
      %s23 = sadd.s32 %s22, 1
      %s24 = scalar_select %p21, %s22, %s23
      %p27 = pneg %p21
      %p28 = scmp.eq.s32.totalorder %s12, 5
      %p29 = por %p27, %p28
      %p30 = scmp.ne.s32.totalorder %s22, %s25
      %p31 = scmp.eq.s32.totalorder %s12, 0
      %p32 = por %p30, %p31
      %p33 = scmp.ne.s32.totalorder %s22, %s25
      %p34 = scmp.eq.s32.totalorder %s17, 5
      %p35 = por %p33, %p34
      %p36 = scmp.ne.s32.totalorder %s25, %s26
      %p37 = scmp.eq.s32.totalorder %s17, 0
      %p38 = por %p36, %p37
      %p39 = scmp.ne.s32.totalorder %s25, %s26
      %p40 = scmp.eq.s32.totalorder %s18, 5
      %p41 = por %p39, %p40
      %p43 = scmp.ne.s32.totalorder %s26, %s42
      %p44 = scmp.eq.s32.totalorder %s18, 0
      %p45 = por %p43, %p44
      %s47 = sadd.s32 %s46, 1
      %p50 = scmp.eq.s32.totalorder %s12, 5
      %p51 = scmp.ne.s32.totalorder %s46, %s48
      %p52 = scmp.eq.s32.totalorder %s12, 0
      %p53 = por %p51, %p52
      %p54 = scmp.ne.s32.totalorder %s46, %s48
      %p55 = scmp.eq.s32.totalorder %s17, 5
      %p56 = por %p54, %p55
      %p57 = scmp.ne.s32.totalorder %s48, %s49
      %p58 = scmp.eq.s32.totalorder %s17, 0
      %p59 = por %p57, %p58
      %p60 = scmp.ne.s32.totalorder %s48, %s49
      %p61 = scmp.eq.s32.totalorder %s18, 5
      %p62 = por %p60, %p61
      %p64 = scmp.ne.s32.totalorder %s49, %s63
      %p65 = scmp.eq.s32.totalorder %s18, 0
      %p66 = por %p64, %p65
      %s68 = sadd.s32 %s67, 1
      %p71 = scmp.eq.s32.totalorder %s12, 5
      %p72 = scmp.ne.s32.totalorder %s67, %s69
      %p73 = scmp.eq.s32.totalorder %s12, 0
      %p74 = por %p72, %p73
      %p75 = scmp.ne.s32.totalorder %s67, %s69
      %p76 = scmp.eq.s32.totalorder %s17, 5
      %p77 = por %p75, %p76
      %p78 = scmp.ne.s32.totalorder %s69, %s70
      %p79 = scmp.eq.s32.totalorder %s17, 0
      %p80 = por %p78, %p79
      %p81 = scmp.ne.s32.totalorder %s69, %s70
      %p82 = scmp.eq.s32.totalorder %s18, 5
      %p83 = por %p81, %p82
      %p85 = scmp.ne.s32.totalorder %s70, %s84
      %p86 = scmp.eq.s32.totalorder %s18, 0
      %p87 = por %p85, %p86
      %s88 = ssub.s32 %s12, %s19
      %p89 = scmp.eq.s32.totalorder %s88, 0
      %s91 = sadd.s32 %s90, 1
      %s92 = scalar_select %p89, %s90, %s91
      %p95 = pneg %p89
      %p96 = scmp.eq.s32.totalorder %s12, 5
      %p97 = por %p95, %p96
      %p98 = scmp.ne.s32.totalorder %s90, %s93
      %p99 = scmp.eq.s32.totalorder %s12, 0
      %p100 = por %p98, %p99
      %p101 = scmp.ne.s32.totalorder %s90, %s93
      %p102 = scmp.eq.s32.totalorder %s17, 5
      %p103 = por %p101, %p102
      %p104 = scmp.ne.s32.totalorder %s93, %s94
      %p105 = scmp.eq.s32.totalorder %s17, 0
      %p106 = por %p104, %p105
      %p107 = scmp.ne.s32.totalorder %s93, %s94
      %p108 = scmp.eq.s32.totalorder %s18, 5
      %p109 = por %p107, %p108
      %p111 = scmp.ne.s32.totalorder %s94, %s110
      %p112 = scmp.eq.s32.totalorder %s18, 0
      %p113 = por %p111, %p112
      %p114 = scmp.le.s32.totalorder 1, %s12
      %p115 = scmp.lt.s32.totalorder %s12, 7
      %p116 = pnand %p114, %p115
      %p117 = pneg %p116
      // Predicated region
      $region9: #{tpu_custom_call.1} parent=5 // pred_check
        _
      $region10: #{tpu_custom_call.1} parent=5 // pred_check_branch
        %119 = sbr.rel (%p116) target = $region12
      $region11: #{tpu_custom_call.1} parent=5 // pred_region
        %s120 = ssub.s32 %s12, 1
        // Predicated region
        $region13: #{tpu_custom_call.1} parent=11 // pred_check
          %p121 = pneg %p59
        $region14: #{tpu_custom_call.1} parent=11 // pred_check_branch
          %123 = sbr.rel (%p121) target = $region16
        $region15: #{tpu_custom_call.1} parent=11 // pred_region
          _
        $region16: #{tpu_custom_call.1} parent=11 // pred_fallthru
          _
        // Predicated region
        $region17: #{tpu_custom_call.1} parent=11 // pred_check
          %p124 = pneg %p80
        $region18: #{tpu_custom_call.1} parent=11 // pred_check_branch
          %126 = sbr.rel (%p124) target = $region20
        $region19: #{tpu_custom_call.1} parent=11 // pred_region
          _
        $region20: #{tpu_custom_call.1} parent=11 // pred_fallthru
          _
      $region12: #{tpu_custom_call.1} parent=5 // pred_fallthru
        _
      %p127 = scmp.lt.s32.totalorder %s12, 6
      // Predicated region
      $region21: #{tpu_custom_call.1} parent=5 // pred_check
        %p128 = pneg %p127
      $region22: #{tpu_custom_call.1} parent=5 // pred_check_branch
        %130 = sbr.rel (%p128) target = $region24
      $region23: #{tpu_custom_call.1} parent=5 // pred_region
        // Predicated region
        $region25: #{tpu_custom_call.1} parent=23 // pred_check
          %p131 = pneg %p32
        $region26: #{tpu_custom_call.1} parent=23 // pred_check_branch
          %133 = sbr.rel (%p131) target = $region28
        $region27: #{tpu_custom_call.1} parent=23 // pred_region
          %p134 = scmp.lt.s32.totalorder %s12, 5
          %s135 = scalar_select %p134, %s12, 5
          %s136 = smul.addr %s135, 2
          %s137 = smul.addr %s136, 4
          %s138 = scalar_lea.vmem %s0, %s137
        $region28: #{tpu_custom_call.1} parent=23 // pred_fallthru
          _
      $region24: #{tpu_custom_call.1} parent=5 // pred_fallthru
        _
      %p139 = scmp.le.s32.totalorder 1, %s12
      %p140 = scmp.lt.s32.totalorder %s12, 7
      %p141 = pnand %p139, %p140
      %p142 = pneg %p141
      // Predicated region
      $region29: #{tpu_custom_call.1} parent=5 // pred_check
        _
      $region30: #{tpu_custom_call.1} parent=5 // pred_check_branch
        %144 = sbr.rel (%p141) target = $region32
      $region31: #{tpu_custom_call.1} parent=5 // pred_region
        %s145 = ssub.s32 %s12, 1
        %p146 = scmp.lt.s32.totalorder %s17, 5
        %s147 = scalar_select %p146, %s17, 5
        %s148 = smul.addr %s147, 2
        %s149 = smul.addr %s148, 4
        %s150 = scalar_lea.vmem %s0, %s149
        %p151 = pneg %p38
        %p152 = pneg %p35
        %p153 = pneg %p59
        %p154 = pneg %p56
        %p155 = pneg %p80
        %p156 = pneg %p77
        %p157 = pneg %p106
        %p158 = pneg %p103
        %s159 = sand.u32 %s93, 1
        %s160 = scalar_lea.sflag [#allocation3], %s159
        %s161 = sand.u32 %s93, 1
        %s162 = smul.addr %s161, 304
        %s163 = scalar_lea.vmem [#allocation2], %s162
        %p164 = scmp.lt.s32.totalorder %s17, 5
        %s165 = scalar_select %p164, %s17, 5
        %s166 = smul.addr %s165, 2
        %s167 = smul.addr %s166, 4
        %s168 = scalar_lea.vmem %s0, %s167
        %v169 = vld [vmem:[%s1] sm:$0xff]
        %v170 = vld [vmem:[%s1 + $0x8] sm:$0xff]
        %v171 = vld [vmem:[%s1 + $0x10] sm:$0xff]
        %v172 = vld [vmem:[%s1 + $0x18] sm:$0xff]
        %v173 = vld [vmem:[%s1 + $0x20] sm:$0xff]
        %v174 = vld [vmem:[%s1 + $0x28] sm:$0xff]
        %v175 = vld [vmem:[%s1 + $0x30] sm:$0xff]
        %v176 = vld [vmem:[%s1 + $0x38] sm:$0xff]
        %v177 = vld [vmem:[%s1 + $0x40] sm:$0xff]
        %v178 = vld [vmem:[%s1 + $0x48] sm:$0xff]
        %v179 = vld [vmem:[%s1 + $0x50] sm:$0xff]
        %v180 = vld [vmem:[%s1 + $0x58] sm:$0xff]
        %v181 = vld [vmem:[%s1 + $0x60] sm:$0xff]
        %v182 = vld [vmem:[%s1 + $0x68] sm:$0xff]
        %v183 = vld [vmem:[%s1 + $0x70] sm:$0xff]
        %v184 = vld [vmem:[%s1 + $0x78] sm:$0xff]
        %v185 = vld [vmem:[%s1 + $0x80] sm:$0xff]
        %v186 = vld [vmem:[%s1 + $0x88] sm:$0xff]
        %v187 = vld [vmem:[%s1 + $0x90] sm:$0x3f]
        %v188 = vld [vmem:[%s168] sm:$0xff]
        %v189 = vld [vmem:[%s2] sm:$0xff]
        %v190 = vld [vmem:[%s2 + $0x8] sm:$0xff]
        %v191 = vld [vmem:[%s2 + $0x10] sm:$0xff]
        %v192 = vld [vmem:[%s2 + $0x18] sm:$0xff]
        %v193 = vld [vmem:[%s2 + $0x20] sm:$0xff]
        %v194 = vld [vmem:[%s2 + $0x28] sm:$0xff]
        %v195 = vld [vmem:[%s2 + $0x30] sm:$0xff]
        %v196 = vld [vmem:[%s2 + $0x38] sm:$0xff]
        %v197 = vld [vmem:[%s2 + $0x40] sm:$0xff]
        %v198 = vld [vmem:[%s2 + $0x48] sm:$0xff]
        %v199 = vld [vmem:[%s2 + $0x50] sm:$0xff]
        %v200 = vld [vmem:[%s2 + $0x58] sm:$0xff]
        %v201 = vld [vmem:[%s2 + $0x60] sm:$0xff]
        %v202 = vld [vmem:[%s2 + $0x68] sm:$0xff]
        %v203 = vld [vmem:[%s2 + $0x70] sm:$0xff]
        %v204 = vld [vmem:[%s2 + $0x78] sm:$0xff]
        %v205 = vld [vmem:[%s2 + $0x80] sm:$0xff]
        %v206 = vld [vmem:[%s2 + $0x88] sm:$0xff]
        %v207 = vld [vmem:[%s2 + $0x90] sm:$0x3f]
        %209 = vset.pattern.permute.xlu0 0
        %210 = vperm.xlu0 %209, %v189
        %v211 = vpop.permute.xlu0 %210
        %214 = vset.pattern.permute.xlu0 0
        %215 = vperm.xlu0 %214, %v190
        %v216 = vpop.permute.xlu0 %215
        %219 = vset.pattern.permute.xlu0 0
        %220 = vperm.xlu0 %219, %v191
        %v221 = vpop.permute.xlu0 %220
        %224 = vset.pattern.permute.xlu0 0
        %225 = vperm.xlu0 %224, %v192
        %v226 = vpop.permute.xlu0 %225
        %229 = vset.pattern.permute.xlu0 0
        %230 = vperm.xlu0 %229, %v193
        %v231 = vpop.permute.xlu0 %230
        %234 = vset.pattern.permute.xlu0 0
        %235 = vperm.xlu0 %234, %v194
        %v236 = vpop.permute.xlu0 %235
        %239 = vset.pattern.permute.xlu0 0
        %240 = vperm.xlu0 %239, %v195
        %v241 = vpop.permute.xlu0 %240
        %244 = vset.pattern.permute.xlu0 0
        %245 = vperm.xlu0 %244, %v196
        %v246 = vpop.permute.xlu0 %245
        %249 = vset.pattern.permute.xlu0 0
        %250 = vperm.xlu0 %249, %v197
        %v251 = vpop.permute.xlu0 %250
        %254 = vset.pattern.permute.xlu0 0
        %255 = vperm.xlu0 %254, %v198
        %v256 = vpop.permute.xlu0 %255
        %259 = vset.pattern.permute.xlu0 0
        %260 = vperm.xlu0 %259, %v199
        %v261 = vpop.permute.xlu0 %260
        %264 = vset.pattern.permute.xlu0 0
        %265 = vperm.xlu0 %264, %v200
        %v266 = vpop.permute.xlu0 %265
        %269 = vset.pattern.permute.xlu0 0
        %270 = vperm.xlu0 %269, %v201
        %v271 = vpop.permute.xlu0 %270
        %274 = vset.pattern.permute.xlu0 0
        %275 = vperm.xlu0 %274, %v202
        %v276 = vpop.permute.xlu0 %275
        %279 = vset.pattern.permute.xlu0 0
        %280 = vperm.xlu0 %279, %v203
        %v281 = vpop.permute.xlu0 %280
        %284 = vset.pattern.permute.xlu0 0
        %285 = vperm.xlu0 %284, %v204
        %v286 = vpop.permute.xlu0 %285
        %289 = vset.pattern.permute.xlu0 0
        %290 = vperm.xlu0 %289, %v205
        %v291 = vpop.permute.xlu0 %290
        %294 = vset.pattern.permute.xlu0 0
        %295 = vperm.xlu0 %294, %v206
        %v296 = vpop.permute.xlu0 %295
        %299 = vset.pattern.permute.xlu0 0
        %300 = vperm.xlu0 %299, %v207
        %v301 = vpop.permute.xlu0 %300
        %v304 = vcombine.high %v188, %v188
        %vm305 = vcmask 31744
        %v307 = vsel %vm305, %v169, 0
        %v310 = vsel %vm305, %v170, 0
        %v313 = vsel %vm305, %v171, 0
        %v316 = vsel %vm305, %v172, 0
        %v319 = vsel %vm305, %v173, 0
        %v322 = vsel %vm305, %v174, 0
        %v325 = vsel %vm305, %v175, 0
        %v328 = vsel %vm305, %v176, 0
        %v331 = vsel %vm305, %v177, 0
        %v334 = vsel %vm305, %v178, 0
        %v337 = vsel %vm305, %v179, 0
        %v340 = vsel %vm305, %v180, 0
        %v343 = vsel %vm305, %v181, 0
        %v346 = vsel %vm305, %v182, 0
        %v349 = vsel %vm305, %v183, 0
        %v352 = vsel %vm305, %v184, 0
        %v355 = vsel %vm305, %v185, 0
        %v358 = vsel %vm305, %v186, 0
        %v361 = vsel %vm305, %v187, 0
        %vm363 = vcmask 1043456
        %v364 = vsel %vm363, %v188, 0
        %v366 = vsel %vm363, %v304, 0
        %368 = vmatprep.subr.mxu0 %v366
        %369 = vmatpush1.msra.mxu0 %v364
        %370 = vmatprep.subr.mxu0 0.0
        %371 = vmatpush1.msra.mxu0 0.0
        %372 = vmatprep.subr.mxu0 0.0
        %373 = vmatpush1.msra.mxu0 0.0
        %374 = vmatprep.subr.mxu0 0.0
        %375 = vmatpush1.msra.mxu0 0.0
        %376 = vmatprep.subr.mxu0 0.0
        %377 = vmatpush1.msra.mxu0 0.0
        %378 = vmatprep.subr.mxu0 0.0
        %379 = vmatpush1.msra.mxu0 0.0
        %380 = vmatprep.subr.mxu0 0.0
        %381 = vmatpush1.msra.mxu0 0.0
        %382 = vmatprep.subr.mxu0 0.0
        %383 = vmatpush1.msra.mxu0 0.0
        %384 = vmatprep.subr.mxu0 0.0
        %385 = vmatpush1.msra.mxu0 0.0
        %386 = vmatprep.subr.mxu0 0.0
        %387 = vmatpush1.msra.mxu0 0.0
        %388 = vmatprep.subr.mxu0 0.0
        %389 = vmatpush1.msra.mxu0 0.0
        %390 = vmatprep.subr.mxu0 0.0
        %391 = vmatpush1.msra.mxu0 0.0
        %392 = vmatprep.subr.mxu0 0.0
        %393 = vmatpush1.msra.mxu0 0.0
        %394 = vmatprep.subr.mxu0 0.0
        %395 = vmatpush1.msra.mxu0 0.0
        %396 = vmatprep.subr.mxu0 0.0
        %397 = vmatpush1.msra.mxu0 0.0
        %398 = vmatprep.subr.mxu0 0.0
        %399 = vmatpush1.msra.mxu0 0.0
        %400 = vmatprep.subr.mxu0 0.0
        %401 = vmatpush1.msra.mxu0 0.0
        %402 = vmatprep.subr.mxu0 0.0
        %403 = vmatpush1.msra.mxu0 0.0
        %404 = vmatprep.subr.mxu0 0.0
        %405 = vmatpush1.msra.mxu0 0.0
        %406 = vmatprep.subr.mxu0 0.0
        %407 = vmatpush1.msra.mxu0 0.0
        %408 = vmatprep.subr.mxu0 0.0
        %409 = vmatpush1.msra.mxu0 0.0
        %410 = vmatprep.subr.mxu0 0.0
        %411 = vmatpush1.msra.mxu0 0.0
        %412 = vmatprep.subr.mxu0 0.0
        %413 = vmatpush1.msra.mxu0 0.0
        %414 = vmatprep.subr.mxu0 0.0
        %415 = vmatpush1.msra.mxu0 0.0
        %416 = vmatprep.subr.mxu0 0.0
        %417 = vmatpush1.msra.mxu0 0.0
        %418 = vmatprep.subr.mxu0 0.0
        %419 = vmatpush1.msra.mxu0 0.0
        %420 = vmatprep.subr.mxu0 0.0
        %421 = vmatpush1.msra.mxu0 0.0
        %422 = vmatprep.subr.mxu0 0.0
        %423 = vmatpush1.msra.mxu0 0.0
        %424 = vmatprep.subr.mxu0 0.0
        %425 = vmatpush1.msra.mxu0 0.0
        %426 = vmatprep.subr.mxu0 0.0
        %427 = vmatpush1.msra.mxu0 0.0
        %428 = vmatprep.subr.mxu0 0.0
        %429 = vmatpush1.msra.mxu0 0.0
        %430 = vmatprep.subr.mxu0 0.0
        %431 = vmatpush1.msra.mxu0 0.0
        %432 = vmatprep.mubr.f32.mxu0 0.0
        %433 = vmatmul.mubr.f32.gmra.mrb[0].mxu0 %v307
        %v434 = vpop.f32.mrb[0].mxu0
        %v435 = vadd.f32 %v211, %v434
        %v436 = vpop.f32.mrb[0].mxu0
        %v437 = vadd.f32 %v211, %v436
        %438 = vmatprep.mubr.f32.mxu0 0.0
        %439 = vmatmul.mubr.f32.gmra.mrb[0].mxu0 %v310
        %v440 = vpop.f32.mrb[0].mxu0
        %v441 = vadd.f32 %v216, %v440
        %v442 = vpop.f32.mrb[0].mxu0
        %v443 = vadd.f32 %v216, %v442
        %444 = vmatprep.mubr.f32.mxu0 0.0
        %445 = vmatmul.mubr.f32.gmra.mrb[0].mxu0 %v313
        %v446 = vpop.f32.mrb[0].mxu0
        %v447 = vadd.f32 %v221, %v446
        %v448 = vpop.f32.mrb[0].mxu0
        %v449 = vadd.f32 %v221, %v448
        %450 = vmatprep.mubr.f32.mxu0 0.0
        %451 = vmatmul.mubr.f32.gmra.mrb[0].mxu0 %v316
        %v452 = vpop.f32.mrb[0].mxu0
        %v453 = vadd.f32 %v226, %v452
        %v454 = vpop.f32.mrb[0].mxu0
        %v455 = vadd.f32 %v226, %v454
        %456 = vmatprep.mubr.f32.mxu0 0.0
        %457 = vmatmul.mubr.f32.gmra.mrb[0].mxu0 %v319
        %v458 = vpop.f32.mrb[0].mxu0
        %v459 = vadd.f32 %v231, %v458
        %v460 = vpop.f32.mrb[0].mxu0
        %v461 = vadd.f32 %v231, %v460
        %462 = vmatprep.mubr.f32.mxu0 0.0
        %463 = vmatmul.mubr.f32.gmra.mrb[0].mxu0 %v322
        %v464 = vpop.f32.mrb[0].mxu0
        %v465 = vadd.f32 %v236, %v464
        %v466 = vpop.f32.mrb[0].mxu0
        %v467 = vadd.f32 %v236, %v466
        %468 = vmatprep.mubr.f32.mxu0 0.0
        %469 = vmatmul.mubr.f32.gmra.mrb[0].mxu0 %v325
        %v470 = vpop.f32.mrb[0].mxu0
        %v471 = vadd.f32 %v241, %v470
        %v472 = vpop.f32.mrb[0].mxu0
        %v473 = vadd.f32 %v241, %v472
        %474 = vmatprep.mubr.f32.mxu0 0.0
        %475 = vmatmul.mubr.f32.gmra.mrb[0].mxu0 %v328
        %v476 = vpop.f32.mrb[0].mxu0
        %v477 = vadd.f32 %v246, %v476
        %v478 = vpop.f32.mrb[0].mxu0
        %v479 = vadd.f32 %v246, %v478
        %480 = vmatprep.mubr.f32.mxu0 0.0
        %481 = vmatmul.mubr.f32.gmra.mrb[0].mxu0 %v331
        %v482 = vpop.f32.mrb[0].mxu0
        %v483 = vadd.f32 %v251, %v482
        %v484 = vpop.f32.mrb[0].mxu0
        %v485 = vadd.f32 %v251, %v484
        %486 = vmatprep.mubr.f32.mxu0 0.0
        %487 = vmatmul.mubr.f32.gmra.mrb[0].mxu0 %v334
        %v488 = vpop.f32.mrb[0].mxu0
        %v489 = vadd.f32 %v256, %v488
        %v490 = vpop.f32.mrb[0].mxu0
        %v491 = vadd.f32 %v256, %v490
        %492 = vmatprep.mubr.f32.mxu0 0.0
        %493 = vmatmul.mubr.f32.gmra.mrb[0].mxu0 %v337
        %v494 = vpop.f32.mrb[0].mxu0
        %v495 = vadd.f32 %v261, %v494
        %v496 = vpop.f32.mrb[0].mxu0
        %v497 = vadd.f32 %v261, %v496
        %498 = vmatprep.mubr.f32.mxu0 0.0
        %499 = vmatmul.mubr.f32.gmra.mrb[0].mxu0 %v340
        %v500 = vpop.f32.mrb[0].mxu0
        %v501 = vadd.f32 %v266, %v500
        %v502 = vpop.f32.mrb[0].mxu0
        %v503 = vadd.f32 %v266, %v502
        %504 = vmatprep.mubr.f32.mxu0 0.0
        %505 = vmatmul.mubr.f32.gmra.mrb[0].mxu0 %v343
        %v506 = vpop.f32.mrb[0].mxu0
        %v507 = vadd.f32 %v271, %v506
        %v508 = vpop.f32.mrb[0].mxu0
        %v509 = vadd.f32 %v271, %v508
        %510 = vmatprep.mubr.f32.mxu0 0.0
        %511 = vmatmul.mubr.f32.gmra.mrb[0].mxu0 %v346
        %v512 = vpop.f32.mrb[0].mxu0
        %v513 = vadd.f32 %v276, %v512
        %v514 = vpop.f32.mrb[0].mxu0
        %v515 = vadd.f32 %v276, %v514
        %516 = vmatprep.mubr.f32.mxu0 0.0
        %517 = vmatmul.mubr.f32.gmra.mrb[0].mxu0 %v349
        %v518 = vpop.f32.mrb[0].mxu0
        %v519 = vadd.f32 %v281, %v518
        %v520 = vpop.f32.mrb[0].mxu0
        %v521 = vadd.f32 %v281, %v520
        %522 = vmatprep.mubr.f32.mxu0 0.0
        %523 = vmatmul.mubr.f32.gmra.mrb[0].mxu0 %v352
        %v524 = vpop.f32.mrb[0].mxu0
        %v525 = vadd.f32 %v286, %v524
        %v526 = vpop.f32.mrb[0].mxu0
        %v527 = vadd.f32 %v286, %v526
        %528 = vmatprep.mubr.f32.mxu0 0.0
        %529 = vmatmul.mubr.f32.gmra.mrb[0].mxu0 %v355
        %v530 = vpop.f32.mrb[0].mxu0
        %v531 = vadd.f32 %v291, %v530
        %v532 = vpop.f32.mrb[0].mxu0
        %v533 = vadd.f32 %v291, %v532
        %534 = vmatprep.mubr.f32.mxu0 0.0
        %535 = vmatmul.mubr.f32.gmra.mrb[0].mxu0 %v358
        %v536 = vpop.f32.mrb[0].mxu0
        %v537 = vadd.f32 %v296, %v536
        %v538 = vpop.f32.mrb[0].mxu0
        %v539 = vadd.f32 %v296, %v538
        %540 = vmatprep.mubr.f32.mxu0 0.0
        %541 = vmatmul.mubr.f32.gmra.mrb[0].mxu0 %v361
        %v542 = vpop.f32.mrb[0].mxu0
        %v543 = vadd.f32 %v301, %v542
        %v544 = vpop.f32.mrb[0].mxu0
        %v545 = vadd.f32 %v301, %v544
        %546 = vdwg.mxu0
        %547 = vst [vmem:[%s163] sm:$0xff] %v435
        %548 = vst [vmem:[%s163 + $0x8] sm:$0xff] %v437
        %549 = vst [vmem:[%s163 + $0x10] sm:$0xff] %v441
        %550 = vst [vmem:[%s163 + $0x18] sm:$0xff] %v443
        %551 = vst [vmem:[%s163 + $0x20] sm:$0xff] %v447
        %552 = vst [vmem:[%s163 + $0x28] sm:$0xff] %v449
        %553 = vst [vmem:[%s163 + $0x30] sm:$0xff] %v453
        %554 = vst [vmem:[%s163 + $0x38] sm:$0xff] %v455
        %555 = vst [vmem:[%s163 + $0x40] sm:$0xff] %v459
        %556 = vst [vmem:[%s163 + $0x48] sm:$0xff] %v461
        %557 = vst [vmem:[%s163 + $0x50] sm:$0xff] %v465
        %558 = vst [vmem:[%s163 + $0x58] sm:$0xff] %v467
        %559 = vst [vmem:[%s163 + $0x60] sm:$0xff] %v471
        %560 = vst [vmem:[%s163 + $0x68] sm:$0xff] %v473
        %561 = vst [vmem:[%s163 + $0x70] sm:$0xff] %v477
        %562 = vst [vmem:[%s163 + $0x78] sm:$0xff] %v479
        %563 = vst [vmem:[%s163 + $0x80] sm:$0xff] %v483
        %564 = vst [vmem:[%s163 + $0x88] sm:$0xff] %v485
        %565 = vst [vmem:[%s163 + $0x90] sm:$0xff] %v489
        %566 = vst [vmem:[%s163 + $0x98] sm:$0xff] %v491
        %567 = vst [vmem:[%s163 + $0xa0] sm:$0xff] %v495
        %568 = vst [vmem:[%s163 + $0xa8] sm:$0xff] %v497
        %569 = vst [vmem:[%s163 + $0xb0] sm:$0xff] %v501
        %570 = vst [vmem:[%s163 + $0xb8] sm:$0xff] %v503
        %571 = vst [vmem:[%s163 + $0xc0] sm:$0xff] %v507
        %572 = vst [vmem:[%s163 + $0xc8] sm:$0xff] %v509
        %573 = vst [vmem:[%s163 + $0xd0] sm:$0xff] %v513
        %574 = vst [vmem:[%s163 + $0xd8] sm:$0xff] %v515
        %575 = vst [vmem:[%s163 + $0xe0] sm:$0xff] %v519
        %576 = vst [vmem:[%s163 + $0xe8] sm:$0xff] %v521
        %577 = vst [vmem:[%s163 + $0xf0] sm:$0xff] %v525
        %578 = vst [vmem:[%s163 + $0xf8] sm:$0xff] %v527
        %579 = vst [vmem:[%s163 + $0x100] sm:$0xff] %v531
        %580 = vst [vmem:[%s163 + $0x108] sm:$0xff] %v533
        %581 = vst [vmem:[%s163 + $0x110] sm:$0xff] %v537
        %582 = vst [vmem:[%s163 + $0x118] sm:$0xff] %v539
        %583 = vst [vmem:[%s163 + $0x120] sm:$0x3f] %v543
        %584 = vst [vmem:[%s163 + $0x128] sm:$0x3f] %v545
        %s585 = sand.u32 %s93, 1
        %s586 = scalar_lea.sflag [#allocation3], %s585
        %s587 = sand.u32 %s93, 1
        %s588 = smul.addr %s587, 304
        %s589 = scalar_lea.vmem [#allocation2], %s588
        // Predicated region
        $region33: #{tpu_custom_call.1} parent=31 // pred_check
          %p590 = pneg %p103
        $region34: #{tpu_custom_call.1} parent=31 // pred_check_branch
          %592 = sbr.rel (%p590) target = $region36
        $region35: #{tpu_custom_call.1} parent=31 // pred_region
          %s594 = ssub.s32 4864, 4864
          %595 = vsyncadd %s586, %s594
          %s596 = smul.addr %s17, 38
          %s597 = smul.addr %s596, 128
          %s598 = scalar_lea.hbm %s3, %s597
          %s599 = sshll.u32 %s589, 4
          %s600 = int_to_ptr.vmem [resolvable:$true] %s599
          %605 = dma.vmem_to_hbm [thread:$0]  %s600, 4864, %s598, %s586, 256, 256, 16
        $region36: #{tpu_custom_call.1} parent=31 // pred_fallthru
          _
      $region32: #{tpu_custom_call.1} parent=5 // pred_fallthru
        _
      %p606 = scmp.le.s32.totalorder 2, %s12
      // Predicated region
      $region37: #{tpu_custom_call.1} parent=5 // pred_check
        %p607 = pneg %p606
      $region38: #{tpu_custom_call.1} parent=5 // pred_check_branch
        %609 = sbr.rel (%p607) target = $region40
      $region39: #{tpu_custom_call.1} parent=5 // pred_region
        %s610 = ssub.s32 %s12, 2
        // Predicated region
        $region41: #{tpu_custom_call.1} parent=39 // pred_check
          %p611 = pneg %p109
        $region42: #{tpu_custom_call.1} parent=39 // pred_check_branch
          %613 = sbr.rel (%p611) target = $region44
        $region43: #{tpu_custom_call.1} parent=39 // pred_region
          %s614 = sand.u32 %s94, 1
          %s615 = scalar_lea.sflag [#allocation3], %s614
          %s616 = sand.u32 %s94, 1
          %s617 = smul.addr %s616, 304
          %s618 = scalar_lea.vmem [#allocation2], %s617
          %619 = dma.done %s615, 4864
        $region44: #{tpu_custom_call.1} parent=39 // pred_fallthru
          _
      $region40: #{tpu_custom_call.1} parent=5 // pred_fallthru
        _
    $region6: #{tpu_custom_call.1} parent=1 // loop_footer
      %s16 = sadd.s32 1, %s12
    $region7: #{tpu_custom_call.1} parent=1 // loop_footer_branch
      %11 = sbr.rel target = $region3
    $region8: #{tpu_custom_call.1} parent=1 // loop_exit
      _
    %620 = vsyncpa [#allocation3], 1
    %s621 = scalar_lea.sflag [#allocation3], 1
    %622 = vsyncpa %s621, 1

</llo_original>
